<compile_context>
chip_gen: v7x
topology: tpu7x:2x2x1
jax: 0.10.0
libtpu: 0.0.40
codegen_flags: <defaults>
</compile_context>

<pallas_src>
import functools
import math

import numpy as np

import jax
import jax.numpy as jnp
from jax import lax
from jax.experimental import pallas as pl
from jax.experimental.pallas import tpu as pltpu


# ----------------------------------------------------------------------------
# Helpers
# ----------------------------------------------------------------------------

def _vmem_capacity_bytes():
    """Physical per-TensorCore VMEM; conservative 64 MiB fallback (v7x)."""
    try:
        info = pltpu.get_tpu_info()
        cap = int(getattr(info, "vmem_capacity_bytes"))
        if cap > 0:
            return cap
    except Exception:
        pass
    return 64 * 1024 * 1024


def _const_spec(shape):
    """Grid-invariant block (weights / biases); single-buffered when supported."""
    index_map = lambda b, i: (0,) * len(shape)
    try:
        return pl.BlockSpec(shape, index_map, pipeline_mode=pl.Buffered(1))
    except Exception:  # older Pallas without pipeline_mode / Buffered
        return pl.BlockSpec(shape, index_map)


def _batch_spec(shape):
    """Per-batch block (index changes only at batch boundaries); single-buffered."""
    index_map = lambda b, i: (b,) + (0,) * (len(shape) - 1)
    try:
        return pl.BlockSpec(shape, index_map, pipeline_mode=pl.Buffered(1))
    except Exception:
        return pl.BlockSpec(shape, index_map)


def _pick_tile(sl, prefer):
    for t in prefer:
        if sl % t == 0:
            return t
    return sl


# ----------------------------------------------------------------------------
# Kernels
# ----------------------------------------------------------------------------

def _kv_projection_kernel(x2_ref, wkv_ref, bkv_ref, kv_ref):
    # Fused K|V projection for one (batch, seq tile): one matmul, 2*hidden output columns.
    x2b = x2_ref[0].astype(jnp.bfloat16)                                   # (ts, hidden)
    kv = jnp.dot(x2b, wkv_ref[...], preferred_element_type=jnp.float32) + bkv_ref[...]
    kv_ref[0] = kv.astype(kv_ref.dtype)                                    # bf16 cache


def _cross_attention_kernel(
    x1_ref, res_ref, kv_ref,
    wq_ref, bq_ref, wo_ref, bo_ref, gamma_ref, beta_ref,
    *refs, num_heads, head_size, eps, store_attn,
):
    if store_attn:
        out_ref, attn_ref, ctx_ref = refs
    else:
        out_ref, ctx_ref = refs
        attn_ref = None

    hidden = num_heads * head_size

    # Q projection (softmax scale pre-folded into wq/bq by the wrapper); bf16 MXU, f32 acc.
    x1b = x1_ref[0].astype(jnp.bfloat16)                                   # (tq, hidden)
    q = jnp.dot(x1b, wq_ref[...], preferred_element_type=jnp.float32) + bq_ref[...]
    qb = q.astype(jnp.bfloat16)

    kvb = kv_ref[0]                                                        # (sl, 2*hidden) bf16

    # Per-head attention via static column slices; context written into a bf16 VMEM scratch.
    # TODO(synk): for head_size < 128 the per-head slices are lane-misaligned; a head-major /
    # K-transposed layout from the KV pre-pass would avoid per-head relayout copies.
    for h in range(num_heads):
        lo, hi = h * head_size, (h + 1) * head_size
        qh = qb[:, lo:hi]                                                  # (tq, hd)
        kh = kvb[:, lo:hi]                                                 # (sl, hd)
        vh = kvb[:, hidden + lo:hidden + hi]                               # (sl, hd)

        s = lax.dot_general(qh, kh, (((1,), (1,)), ((), ())),
                            preferred_element_type=jnp.float32)            # (tq, sl)
        m = jnp.max(s, axis=-1, keepdims=True)
        e = jnp.exp(s - m)
        d = jnp.sum(e, axis=-1, keepdims=True)
        p = e * pl.reciprocal(d, approx=True)                              # softmax probs

        pb = p.astype(jnp.bfloat16)                # single f32->bf16 pack, reused twice below
        # TODO(synk): attention dropout omitted (inference / eval mode).
        if store_attn:
            attn_ref[0, h] = pb if attn_ref.dtype == jnp.bfloat16 else p.astype(attn_ref.dtype)
        ctx_ref[:, lo:hi] = jnp.dot(pb, vh,
                                    preferred_element_type=jnp.float32).astype(ctx_ref.dtype)

    # Output layer: dense + residual (matching tile of inputs2) + LayerNorm.
    dense = jnp.dot(ctx_ref[...], wo_ref[...], preferred_element_type=jnp.float32) + bo_ref[...]
    # TODO(synk): output dropout omitted (inference / eval mode).
    resid = dense + res_ref[0]
    mean = jnp.mean(resid, axis=-1, keepdims=True)
    cen = resid - mean
    var = jnp.mean(cen * cen, axis=-1, keepdims=True)
    normed = cen * lax.rsqrt(var + eps)
    out_ref[0] = (normed * gamma_ref[...] + beta_ref[...]).astype(out_ref.dtype)


# ----------------------------------------------------------------------------
# Wrapper
# ----------------------------------------------------------------------------

def cross_attention_layer(inputs1, inputs2, params, *, num_heads,
                          attn_dtype=jnp.bfloat16, return_attn=True):
    bs, sl, hidden = inputs1.shape
    assert inputs2.shape == (bs, sl, hidden)   # module asserts sl1 == sl2
    assert hidden % num_heads == 0
    head_size = hidden // num_heads
    eps = 1e-12
    scale = 1.0 / math.sqrt(head_size)

    wq, bq, wk, bk, wv, bv, wo, bo, gamma, beta = params

    # Trace-time weight packing: fold softmax scale into Q projection, fuse K|V,
    # cast matmul weights to bf16; biases / LayerNorm affine stay f32.
    wq_p = (wq * scale).astype(jnp.bfloat16)
    bq_p = (bq * scale).astype(jnp.float32)
    wkv_p = jnp.concatenate([wk, wv], axis=1).astype(jnp.bfloat16)   # (hidden, 2*hidden)
    bkv_p = jnp.concatenate([bk, bv], axis=1).astype(jnp.float32)    # (1, 2*hidden)
    wo_p = wo.astype(jnp.bfloat16)

    # Chip-aware VMEM budget and query-tile size.
    vmem_cap = _vmem_capacity_bytes()
    vmem_limit = min((vmem_cap * 3) // 4, 96 * 1024 * 1024)          # 48 MiB on 64-MiB parts
    prefer = (128, 256) if vmem_cap <= 64 * 1024 * 1024 else (256, 128)
    tq = _pick_tile(sl, prefer)
    n_qt = sl // tq

    # ---- pass 1: K|V projection cache, once per (batch, seq tile), stored in bf16 ----
    kv_flops = 2 * bs * sl * hidden * (2 * hidden)
    kv_bytes = (bs * sl * hidden * 4 + hidden * 2 * hidden * 2 + bs * sl * 2 * hidden * 2)
    kv_cache = pl.pallas_call(
        _kv_projection_kernel,
        out_shape=jax.ShapeDtypeStruct((bs, sl, 2 * hidden), jnp.bfloat16),
        grid_spec=pltpu.PrefetchScalarGridSpec(
            num_scalar_prefetch=0,
            grid=(bs, n_qt),
            in_specs=[
                pl.BlockSpec((1, tq, hidden), lambda b, si: (b, si, 0)),   # inputs2 tile
                _const_spec((hidden, 2 * hidden)),                         # W[k|v]
                _const_spec((1, 2 * hidden)),                              # b[k|v]
            ],
            out_specs=pl.BlockSpec((1, tq, 2 * hidden), lambda b, si: (b, si, 0)),
        ),
        compiler_params=pltpu.CompilerParams(
            dimension_semantics=("parallel", "parallel"),
            vmem_limit_bytes=vmem_limit,
        ),
        cost_estimate=pl.CostEstimate(flops=kv_flops, transcendentals=0,
                                      bytes_accessed=kv_bytes),
    )(inputs2, wkv_p, bkv_p)

    # ---- pass 2: fused attention + output layer ----
    kernel = functools.partial(_cross_attention_kernel, num_heads=num_heads,
                               head_size=head_size, eps=eps, store_attn=return_attn)

    attn_flops = 2 * bs * sl * (2 * hidden * hidden + 2 * sl * hidden)
    attn_trans = bs * num_heads * sl * sl
    attn_bytes = (2 * bs * sl * hidden * 4            # inputs1 + residual tiles (f32)
                  + bs * sl * 2 * hidden * 2          # K|V cache (bf16)
                  + 2 * hidden * hidden * 2           # Wq + Wo (bf16)
                  + bs * sl * hidden * 4)             # hidden-states output
    if return_attn:
        attn_bytes += bs * num_heads * sl * sl * int(np.dtype(attn_dtype).itemsize)

    hidden_shape = jax.ShapeDtypeStruct((bs, sl, hidden), inputs1.dtype)
    hidden_spec = pl.BlockSpec((1, tq, hidden), lambda b, qi: (b, qi, 0))
    if return_attn:
        out_shape = (hidden_shape,
                     jax.ShapeDtypeStruct((bs, num_heads, sl, sl), attn_dtype))
        out_specs = (hidden_spec,
                     pl.BlockSpec((1, num_heads, tq, sl), lambda b, qi: (b, 0, qi, 0)))
    else:
        out_shape = hidden_shape
        out_specs = hidden_spec

    results = pl.pallas_call(
        kernel,
        out_shape=out_shape,
        grid_spec=pltpu.PrefetchScalarGridSpec(
            num_scalar_prefetch=0,
            grid=(bs, n_qt),
            in_specs=[
                pl.BlockSpec((1, tq, hidden), lambda b, qi: (b, qi, 0)),   # inputs1 (q tile)
                pl.BlockSpec((1, tq, hidden), lambda b, qi: (b, qi, 0)),   # inputs2 residual tile
                _batch_spec((1, sl, 2 * hidden)),                          # cached K|V (bf16)
                _const_spec((hidden, hidden)), _const_spec((1, hidden)),   # Wq*scale, bq*scale
                _const_spec((hidden, hidden)), _const_spec((1, hidden)),   # Wo, bo
                _const_spec((1, hidden)), _const_spec((1, hidden)),        # gamma, beta
            ],
            out_specs=out_specs,
            scratch_shapes=[pltpu.VMEM((tq, hidden), jnp.bfloat16)],       # per-head ctx scratch
        ),
        compiler_params=pltpu.CompilerParams(
            dimension_semantics=("parallel", "parallel"),
            vmem_limit_bytes=vmem_limit,
        ),
        cost_estimate=pl.CostEstimate(flops=attn_flops, transcendentals=attn_trans,
                                      bytes_accessed=attn_bytes),
    )(inputs1, inputs2, kv_cache, wq_p, bq_p, wo_p, bo, gamma, beta)

    if return_attn:
        out_hidden, attn = results
        return out_hidden, attn
    return results, None


# ----------------------------------------------------------------------------
# Parameters / reference
# ----------------------------------------------------------------------------

def init_params(key, hidden):
    # Deterministic synthetic parameters; Linear weights stored as (in, out)
    # (already transposed relative to torch's (out, in)).
    keys = jax.random.split(key, 8)
    bound = 1.0 / math.sqrt(hidden)
    wq = jax.random.uniform(keys[0], (hidden, hidden), jnp.float32, -bound, bound)
    bq = jax.random.uniform(keys[1], (1, hidden), jnp.float32, -bound, bound)
    wk = jax.random.uniform(keys[2], (hidden, hidden), jnp.float32, -bound, bound)
    bk = jax.random.uniform(keys[3], (1, hidden), jnp.float32, -bound, bound)
    wv = jax.random.uniform(keys[4], (hidden, hidden), jnp.float32, -bound, bound)
    bv = jax.random.uniform(keys[5], (1, hidden), jnp.float32, -bound, bound)
    wo = jax.random.uniform(keys[6], (hidden, hidden), jnp.float32, -bound, bound)
    bo = jax.random.uniform(keys[7], (1, hidden), jnp.float32, -bound, bound)
    gamma = jnp.ones((1, hidden), jnp.float32)
    beta = jnp.zeros((1, hidden), jnp.float32)
    return (wq, bq, wk, bk, wv, bv, wo, bo, gamma, beta)


def reference_jax(inputs1, inputs2, params, *, num_heads):
    # Pure-JAX f32 reference for sanity checking.
    wq, bq, wk, bk, wv, bv, wo, bo, gamma, beta = params
    bs, sl, hidden = inputs1.shape
    hd = hidden // num_heads
    q = (inputs1 @ wq + bq).reshape(bs, sl, num_heads, hd).transpose(0, 2, 1, 3)
    k = (inputs2 @ wk + bk).reshape(bs, sl, num_heads, hd).transpose(0, 2, 1, 3)
    v = (inputs2 @ wv + bv).reshape(bs, sl, num_heads, hd).transpose(0, 2, 1, 3)
    scores = jnp.einsum('bhqd,bhkd->bhqk', q, k) / math.sqrt(hd)
    probs = jax.nn.softmax(scores, axis=-1)
    ctx = jnp.einsum('bhqk,bhkd->bhqd', probs, v)
    ctx = ctx.transpose(0, 2, 1, 3).reshape(bs, sl, hidden)
    dense = ctx @ wo + bo
    resid = dense + inputs2
    mean = resid.mean(-1, keepdims=True)
    var = ((resid - mean) ** 2).mean(-1, keepdims=True)
    out = (resid - mean) / jnp.sqrt(var + 1e-12) * gamma + beta
    return out, probs


if __name__ == "__main__":
    batch, seq, hidden, num_heads = 2, 8, 32, 4

    key = jax.random.PRNGKey(0)
    k1, k2, kp = jax.random.split(key, 3)
    inputs1 = jax.random.normal(k1, (batch, seq, hidden), jnp.float32)
    inputs2 = jax.random.normal(k2, (batch, seq, hidden), jnp.float32)
    params = init_params(kp, hidden)

    out_hidden, attn = cross_attention_layer(inputs1, inputs2, params,
                                             num_heads=num_heads)
    jax.block_until_ready(out_hidden)
    jax.block_until_ready(attn)

    ref_hidden, ref_attn = reference_jax(inputs1, inputs2, params,
                                         num_heads=num_heads)
    # bf16 matmul operands + bf16 probs output + approx softmax reciprocal -> loosened tolerances.
    attn_f32 = attn.astype(jnp.float32)
    assert jnp.allclose(out_hidden, ref_hidden, atol=5e-2, rtol=5e-2), \
        float(jnp.max(jnp.abs(out_hidden - ref_hidden)))
    assert jnp.allclose(attn_f32, ref_attn, atol=2e-2, rtol=2e-2), \
        float(jnp.max(jnp.abs(attn_f32 - ref_attn)))

    print("KERNEL_OK")
</pallas_src>

<mosaic_0001>
module attributes {stable_mosaic.version = 11 : i64} {
  func.func @_kv_projection_kernel(%arg0: i32, %arg1: i32, %arg2: memref<1x8x32xf32, #tpu.memory_space<vmem>>, %arg3: memref<32x64xbf16, #tpu.memory_space<vmem>>, %arg4: memref<1x64xf32, #tpu.memory_space<vmem>>, %arg5: memref<1x8x64xbf16, #tpu.memory_space<vmem>>) attributes {dimension_semantics = [#tpu.dimension_semantics<parallel>, #tpu.dimension_semantics<parallel>], iteration_bounds = array<i64: 2, 1>, scalar_prefetch = 0 : i64, scratch_operands = 0 : i64, tpu.core_type = #tpu.core_type<tc>, window_params = [{transform_indices = @transform_0, window_bounds = array<i64: 1, 8, 32>}, {pipeline_mode = #tpu.pipeline_mode<synchronous>, transform_indices = @transform_1, window_bounds = array<i64: 32, 64>}, {pipeline_mode = #tpu.pipeline_mode<synchronous>, transform_indices = @transform_2, window_bounds = array<i64: 1, 64>}, {transform_indices = @transform_3, window_bounds = array<i64: 1, 8, 64>}]} {
    %c0 = arith.constant 0 : index
    %c0_0 = arith.constant 0 : index
    %c0_1 = arith.constant 0 : index
    %0 = vector.load %arg2[%c0, %c0_0, %c0_1] : memref<1x8x32xf32, #tpu.memory_space<vmem>>, vector<1x8x32xf32>
    %1 = vector.shape_cast %0 : vector<1x8x32xf32> to vector<8x32xf32>
    %2 = arith.truncf %1 : vector<8x32xf32> to vector<8x32xbf16>
    %c0_2 = arith.constant 0 : index
    %c0_3 = arith.constant 0 : index
    %3 = vector.load %arg3[%c0_2, %c0_3] : memref<32x64xbf16, #tpu.memory_space<vmem>>, vector<32x64xbf16>
    %cst = arith.constant dense<0.000000e+00> : vector<8x64xf32>
    %4 = tpu.matmul %2, %3, %cst {dimension_numbers = #tpu.dot_dimension_numbers<[1], [0], [0], [1], [0, 0, 1, 1], [], []>} : vector<8x32xbf16>, vector<32x64xbf16>, vector<8x64xf32> -> vector<8x64xf32>
    %c0_4 = arith.constant 0 : index
    %c0_5 = arith.constant 0 : index
    %5 = vector.load %arg4[%c0_4, %c0_5] : memref<1x64xf32, #tpu.memory_space<vmem>>, vector<1x64xf32>
    %6 = vector.broadcast %5 : vector<1x64xf32> to vector<8x64xf32>
    %7 = arith.addf %4, %6 : vector<8x64xf32>
    %8 = arith.truncf %7 : vector<8x64xf32> to vector<8x64xbf16>
    %c0_6 = arith.constant 0 : index
    %c0_7 = arith.constant 0 : index
    %c0_8 = arith.constant 0 : index
    %9 = vector.load %arg5[%c0_6, %c0_7, %c0_8] : memref<1x8x64xbf16, #tpu.memory_space<vmem>>, vector<1x8x64xbf16>
    %10 = vector.shape_cast %9 : vector<1x8x64xbf16> to vector<8x64xbf16>
    %11 = vector.shape_cast %8 : vector<8x64xbf16> to vector<1x8x64xbf16>
    tpu.vector_store %arg5[%c0_6, %c0_7, %c0_8], %11 {strides = array<i32>} : memref<1x8x64xbf16, #tpu.memory_space<vmem>>, vector<1x8x64xbf16>,
    return
  }
  func.func @transform_0(%arg0: i32, %arg1: i32) -> (i32, i32, i32) {
    %c0_i32 = arith.constant 0 : i32
    %c0_i32_0 = arith.constant 0 : i32
    return %arg0, %arg1, %c0_i32 : i32, i32, i32
  }
  func.func @transform_1(%arg0: i32, %arg1: i32) -> (i32, i32) {
    %c0_i32 = arith.constant 0 : i32
    %c0_i32_0 = arith.constant 0 : i32
    %c0_i32_1 = arith.constant 0 : i32
    return %c0_i32, %c0_i32_0 : i32, i32
  }
  func.func @transform_2(%arg0: i32, %arg1: i32) -> (i32, i32) {
    %c0_i32 = arith.constant 0 : i32
    %c0_i32_0 = arith.constant 0 : i32
    %c0_i32_1 = arith.constant 0 : i32
    return %c0_i32, %c0_i32_0 : i32, i32
  }
  func.func @transform_3(%arg0: i32, %arg1: i32) -> (i32, i32, i32) {
    %c0_i32 = arith.constant 0 : i32
    %c0_i32_0 = arith.constant 0 : i32
    return %arg0, %arg1, %c0_i32 : i32, i32, i32
  }
}

</mosaic_0001>

<llo_original>
// kernel: tpu_custom_call.1
$region0: #{tpu_custom_call.1}
  #allocation0 [shape = 'u32[]', space=smem, size = 0x4, offset = 0x4, fixed_abs, tag = 'smem constant byte address 0x4 - core index']
  #allocation1 [shape = 'u32[144,128]{1,0:T(1,128)}', space=vmem, size = 0x12000, scoped, tag = 'internal scratch']
  %s0 = inlined_call_operand.hbm [shape: f32[2,8,32], index: 0, kind: input, shape index: {}]
  %s1 = inlined_call_operand.hbm [shape: bf16[32,64], index: 1, kind: input, shape index: {}]
  %s2 = inlined_call_operand.vmem [shape: f32[1,64], index: 2, kind: input, shape index: {}]
  %s3 = inlined_call_operand.hbm [shape: bf16[2,8,64], index: 3, kind: output, shape index: {}]
  %s4 = sld [smem:[#allocation0]]
  $region53: #{tpu_custom_call.1} parent=0
    _
  %s6 = ssub.s32 1, %s4
  %s7 = scalar_select 0, %s6, %s4
  $region1: #{tpu_custom_call.1} parent=0
    #allocation2 [shape = 'u8[8192]{0}', space=vmem, size = 0x2000, scoped, tag = 'input window, operand 0']
    #allocation3 [shape = 's32[2]{0}', space=sflag, size = 0x8, scoped, tag = 'scoped memory for tpu_custom_call.1']
    #allocation4 [shape = 's32[2]{0}', space=sflag, size = 0x8, scoped, tag = 'scoped memory for tpu_custom_call.1']
    #allocation5 [shape = 'u8[8192]{0}', space=vmem, size = 0x2000, scoped, tag = 'input window, operand 1, single buffered']
    #allocation6 [shape = 's32[1]{0}', space=sflag, size = 0x4, scoped, tag = 'scoped memory for tpu_custom_call.1']
    #allocation7 [shape = 'u8[4096]{0}', space=vmem, size = 0x1000, scoped, tag = 'output window, operand 0']
    %8 = vsyncpa [#allocation3], 0
    %s9 = scalar_lea.sflag [#allocation3], 1
    %10 = vsyncpa %s9, 0
    %11 = vsyncpa [#allocation6], 0
    %12 = vsyncpa [#allocation4], 0
    %s13 = scalar_lea.sflag [#allocation4], 1
    %14 = vsyncpa %s13, 0
    loop: start=0, step=1, limit=4
    $region2: #{tpu_custom_call.1} parent=1 // loop_pre_header
      _
    $region3: #{tpu_custom_call.1} parent=1 // loop_header
      %s16 = sphi 0, %s20
      %p17 = scmp.ge.s32.totalorder %s16, 4
      %s23 = sphi 0, %s35
      %s24 = sphi 0, %s31
      %s25 = sphi 0, %s23
      %s26 = sphi 0, %s24
      %s27 = sphi 0, %s25
      %s28 = sphi 0, %s26
      %s40 = sphi 0, %s42
      %s43 = sphi 0, %s40
      %s44 = sphi 0, %s43
      %s60 = sphi 0, %s44
      %s64 = sphi 0, %s64
      %s66 = sphi 0, %s64
      %s67 = sphi 0, %s66
      %s81 = sphi 0, %s67
      %s85 = sphi 0, %s85
      %s87 = sphi 0, %s85
      %s88 = sphi 0, %s87
      %s102 = sphi 0, %s88
      %s110 = sphi 0, %s112
      %s113 = sphi 0, %s110
      %s114 = sphi 0, %s113
      %s130 = sphi 0, %s114
    $region4: #{tpu_custom_call.1} parent=1 // loop_header_branch
      %19 = sbr.rel (%p17) target = $region8
    $region5: #{tpu_custom_call.1} parent=1 // loop_body
      %s21 = ssub.s32 %s16, 1
      %s22 = ssub.s32 %s16, 2
      %s29 = sadd.s32 1, %s24
      %p30 = scmp.ge.s32.totalorder %s29, 1
      %s31 = scalar_select %p30, 0, %s29
      %s32 = sadd.s32 1, %s23
      %s33 = scalar_select %p30, %s32, %s23
      %p34 = scmp.ge.s32.totalorder %s33, 2
      %s35 = scalar_select %p34, 0, %s33
      %s36 = ssub.s32 %s23, %s35
      %s37 = ssub.s32 %s24, %s31
      %s38 = sor.u32 %s36, %s37
      %p39 = scmp.eq.s32.totalorder %s38, 0
      %s41 = sadd.s32 %s40, 1
      %s42 = scalar_select %p39, %s40, %s41
      %p45 = pneg %p39
      %p46 = scmp.eq.s32.totalorder %s16, 1
      %p47 = por %p45, %p46
      %p48 = scmp.ne.s32.totalorder %s40, %s43
      %p49 = scmp.eq.s32.totalorder %s16, 0
      %p50 = por %p48, %p49
      %p51 = scmp.ne.s32.totalorder %s40, %s43
      %p52 = scmp.eq.s32.totalorder %s21, 1
      %p53 = por %p51, %p52
      %p54 = scmp.ne.s32.totalorder %s43, %s44
      %p55 = scmp.eq.s32.totalorder %s21, 0
      %p56 = por %p54, %p55
      %p57 = scmp.ne.s32.totalorder %s43, %s44
      %p58 = scmp.eq.s32.totalorder %s22, 1
      %p59 = por %p57, %p58
      %p61 = scmp.ne.s32.totalorder %s44, %s60
      %p62 = scmp.eq.s32.totalorder %s22, 0
      %p63 = por %p61, %p62
      %s65 = sadd.s32 %s64, 1
      %p68 = scmp.eq.s32.totalorder %s16, 1
      %p69 = scmp.ne.s32.totalorder %s64, %s66
      %p70 = scmp.eq.s32.totalorder %s16, 0
      %p71 = por %p69, %p70
      %p72 = scmp.ne.s32.totalorder %s64, %s66
      %p73 = scmp.eq.s32.totalorder %s21, 1
      %p74 = por %p72, %p73
      %p75 = scmp.ne.s32.totalorder %s66, %s67
      %p76 = scmp.eq.s32.totalorder %s21, 0
      %p77 = por %p75, %p76
      %p78 = scmp.ne.s32.totalorder %s66, %s67
      %p79 = scmp.eq.s32.totalorder %s22, 1
      %p80 = por %p78, %p79
      %p82 = scmp.ne.s32.totalorder %s67, %s81
      %p83 = scmp.eq.s32.totalorder %s22, 0
      %p84 = por %p82, %p83
      %s86 = sadd.s32 %s85, 1
      %p89 = scmp.eq.s32.totalorder %s16, 1
      %p90 = scmp.ne.s32.totalorder %s85, %s87
      %p91 = scmp.eq.s32.totalorder %s16, 0
      %p92 = por %p90, %p91
      %p93 = scmp.ne.s32.totalorder %s85, %s87
      %p94 = scmp.eq.s32.totalorder %s21, 1
      %p95 = por %p93, %p94
      %p96 = scmp.ne.s32.totalorder %s87, %s88
      %p97 = scmp.eq.s32.totalorder %s21, 0
      %p98 = por %p96, %p97
      %p99 = scmp.ne.s32.totalorder %s87, %s88
      %p100 = scmp.eq.s32.totalorder %s22, 1
      %p101 = por %p99, %p100
      %p103 = scmp.ne.s32.totalorder %s88, %s102
      %p104 = scmp.eq.s32.totalorder %s22, 0
      %p105 = por %p103, %p104
      %s106 = ssub.s32 %s23, %s35
      %s107 = ssub.s32 %s24, %s31
      %s108 = sor.u32 %s106, %s107
      %p109 = scmp.eq.s32.totalorder %s108, 0
      %s111 = sadd.s32 %s110, 1
      %s112 = scalar_select %p109, %s110, %s111
      %p115 = pneg %p109
      %p116 = scmp.eq.s32.totalorder %s16, 1
      %p117 = por %p115, %p116
      %p118 = scmp.ne.s32.totalorder %s110, %s113
      %p119 = scmp.eq.s32.totalorder %s16, 0
      %p120 = por %p118, %p119
      %p121 = scmp.ne.s32.totalorder %s110, %s113
      %p122 = scmp.eq.s32.totalorder %s21, 1
      %p123 = por %p121, %p122
      %p124 = scmp.ne.s32.totalorder %s113, %s114
      %p125 = scmp.eq.s32.totalorder %s21, 0
      %p126 = por %p124, %p125
      %p127 = scmp.ne.s32.totalorder %s113, %s114
      %p128 = scmp.eq.s32.totalorder %s22, 1
      %p129 = por %p127, %p128
      %p131 = scmp.ne.s32.totalorder %s114, %s130
      %p132 = scmp.eq.s32.totalorder %s22, 0
      %p133 = por %p131, %p132
      %p134 = scmp.le.s32.totalorder 1, %s16
      %p135 = scmp.lt.s32.totalorder %s16, 3
      %p136 = pnand %p134, %p135
      %p137 = pneg %p136
      // Predicated region
      $region9: #{tpu_custom_call.1} parent=5 // pred_check
        _
      $region10: #{tpu_custom_call.1} parent=5 // pred_check_branch
        %139 = sbr.rel (%p136) target = $region12
      $region11: #{tpu_custom_call.1} parent=5 // pred_region
        %s140 = ssub.s32 %s16, 1
        // Predicated region
        $region13: #{tpu_custom_call.1} parent=11 // pred_check
          %p141 = pneg %p77
        $region14: #{tpu_custom_call.1} parent=11 // pred_check_branch
          %143 = sbr.rel (%p141) target = $region16
        $region15: #{tpu_custom_call.1} parent=11 // pred_region
          %s145 = ssub.s32 256, 256
          %146 = vsyncadd [#allocation6], %s145
          %s147 = sshll.u32 [#allocation5], 4
          %s148 = int_to_ptr.vmem [resolvable:$true] %s147
          %153 = dma.hbm_to_vmem [thread:$0]  %s1, 256, %s148, [#allocation6], 64, 64, 4
        $region16: #{tpu_custom_call.1} parent=11 // pred_fallthru
          _
        // Predicated region
        $region17: #{tpu_custom_call.1} parent=11 // pred_check
          %p154 = pneg %p98
        $region18: #{tpu_custom_call.1} parent=11 // pred_check_branch
          %156 = sbr.rel (%p154) target = $region20
        $region19: #{tpu_custom_call.1} parent=11 // pred_region
          _
        $region20: #{tpu_custom_call.1} parent=11 // pred_fallthru
          _
      $region12: #{tpu_custom_call.1} parent=5 // pred_fallthru
        _
      %p157 = scmp.lt.s32.totalorder %s16, 2
      // Predicated region
      $region21: #{tpu_custom_call.1} parent=5 // pred_check
        %p158 = pneg %p157
      $region22: #{tpu_custom_call.1} parent=5 // pred_check_branch
        %160 = sbr.rel (%p158) target = $region24
      $region23: #{tpu_custom_call.1} parent=5 // pred_region
        // Predicated region
        $region25: #{tpu_custom_call.1} parent=23 // pred_check
          %p161 = pneg %p50
        $region26: #{tpu_custom_call.1} parent=23 // pred_check_branch
          %163 = sbr.rel (%p161) target = $region28
        $region27: #{tpu_custom_call.1} parent=23 // pred_region
          %s164 = sand.u32 %s40, 1
          %s165 = scalar_lea.sflag [#allocation3], %s164
          %s166 = sand.u32 %s40, 1
          %s167 = smul.addr %s166, 8
          %s168 = scalar_lea.vmem [#allocation2], %s167
          %s170 = ssub.s32 128, 128
          %171 = vsyncadd %s165, %s170
          %s172 = sadd.s32 %s24, %s23
          %s173 = smul.addr %s172, 128
          %s174 = scalar_lea.hbm %s0, %s173
          %s176 = sshll.u32 %s168, 4
          %s177 = int_to_ptr.vmem [resolvable:$true] %s176
          %179 = dma.hbm_to_vmem [thread:$0]  %s174, 128, %s177, %s165
        $region28: #{tpu_custom_call.1} parent=23 // pred_fallthru
          _
      $region24: #{tpu_custom_call.1} parent=5 // pred_fallthru
        _
      %p180 = scmp.le.s32.totalorder 1, %s16
      %p181 = scmp.lt.s32.totalorder %s16, 3
      %p182 = pnand %p180, %p181
      %p183 = pneg %p182
      // Predicated region
      $region29: #{tpu_custom_call.1} parent=5 // pred_check
        _
      $region30: #{tpu_custom_call.1} parent=5 // pred_check_branch
        %185 = sbr.rel (%p182) target = $region32
      $region31: #{tpu_custom_call.1} parent=5 // pred_region
        %s186 = ssub.s32 %s16, 1
        %s187 = sand.u32 %s43, 1
        %s188 = scalar_lea.sflag [#allocation3], %s187
        %s189 = sand.u32 %s43, 1
        %s190 = smul.addr %s189, 8
        %s191 = scalar_lea.vmem [#allocation2], %s190
        // Predicated region
        $region33: #{tpu_custom_call.1} parent=31 // pred_check
          %p192 = pneg %p56
        $region34: #{tpu_custom_call.1} parent=31 // pred_check_branch
          %194 = sbr.rel (%p192) target = $region36
        $region35: #{tpu_custom_call.1} parent=31 // pred_region
          %195 = dma.done %s188, 128
        $region36: #{tpu_custom_call.1} parent=31 // pred_fallthru
          _
        // Predicated region
        $region37: #{tpu_custom_call.1} parent=31 // pred_check
          %p196 = pneg %p77
        $region38: #{tpu_custom_call.1} parent=31 // pred_check_branch
          %198 = sbr.rel (%p196) target = $region40
        $region39: #{tpu_custom_call.1} parent=31 // pred_region
          %199 = dma.done [#allocation6], 256
        $region40: #{tpu_custom_call.1} parent=31 // pred_fallthru
          _
        %s200 = sand.u32 %s43, 1
        %s201 = scalar_lea.sflag [#allocation3], %s200
        %s202 = sand.u32 %s43, 1
        %s203 = smul.addr %s202, 8
        %s204 = scalar_lea.vmem [#allocation2], %s203
        %p205 = pneg %p56
        %p206 = pneg %p53
        %p207 = pneg %p77
        %p208 = pneg %p74
        %p209 = pneg %p98
        %p210 = pneg %p95
        %p211 = pneg %p126
        %p212 = pneg %p123
        %s213 = sand.u32 %s113, 1
        %s214 = scalar_lea.sflag [#allocation4], %s213
        %s215 = sand.u32 %s113, 1
        %s216 = smul.addr %s215, 4
        %s217 = scalar_lea.vmem [#allocation7], %s216
        %v219 = vld [vmem:[%s191] sm:$0xff]
        %v220 = vpack.c.bf16 %v219, %v219
        %v221 = vld [vmem:[#allocation5] sm:$0xf]
        %v222 = vld [vmem:[#allocation5 + $0x4] sm:$0xf]
        %v223 = vld [vmem:[#allocation5 + $0x8] sm:$0xf]
        %v224 = vld [vmem:[#allocation5 + $0xc] sm:$0xf]
        %v225 = vld [vmem:[%s2] sm:$0x1]
        %v227 = vlaneseq
        %v228 = vshrl.u32 %v227, 7
        %v229 = vsub.s32 0, %v228
        %v230 = vrot.slane %v225, %v229
        %v236 = vunpack.c.l.b16 %v221
        %v237 = vunpack.c.l.b16 %v222
        %v238 = vunpack.c.l.b16 %v223
        %v239 = vunpack.c.l.b16 %v224
        %v240 = vpack.c.b16 %v237, %v236
        %v241 = vpack.c.b16 %v239, %v238
        %vm244 = vcmask 261120
        %v246 = vsel %vm244, %v220, 0
        %248 = vmatprep.subr.bf16.mxu0 0
        %249 = vmatpush1.bf16.msra.mxu0 %v240
        %250 = vmatprep.subr.bf16.mxu0 0
        %251 = vmatpush1.bf16.msra.mxu0 %v241
        %252 = vmatprep.subr.bf16.mxu0 0
        %253 = vmatpush1.bf16.msra.mxu0 0
        %254 = vmatprep.subr.bf16.mxu0 0
        %255 = vmatpush1.bf16.msra.mxu0 0
        %256 = vmatprep.subr.bf16.mxu0 0
        %257 = vmatpush1.bf16.msra.mxu0 0
        %258 = vmatprep.subr.bf16.mxu0 0
        %259 = vmatpush1.bf16.msra.mxu0 0
        %260 = vmatprep.subr.bf16.mxu0 0
        %261 = vmatpush1.bf16.msra.mxu0 0
        %262 = vmatprep.subr.bf16.mxu0 0
        %263 = vmatpush1.bf16.msra.mxu0 0
        %264 = vmatprep.subr.bf16.mxu0 0
        %265 = vmatpush1.bf16.msra.mxu0 0
        %266 = vmatprep.subr.bf16.mxu0 0
        %267 = vmatpush1.bf16.msra.mxu0 0
        %268 = vmatprep.subr.bf16.mxu0 0
        %269 = vmatpush1.bf16.msra.mxu0 0
        %270 = vmatprep.subr.bf16.mxu0 0
        %271 = vmatpush1.bf16.msra.mxu0 0
        %272 = vmatprep.subr.bf16.mxu0 0
        %273 = vmatpush1.bf16.msra.mxu0 0
        %274 = vmatprep.subr.bf16.mxu0 0
        %275 = vmatpush1.bf16.msra.mxu0 0
        %276 = vmatprep.subr.bf16.mxu0 0
        %277 = vmatpush1.bf16.msra.mxu0 0
        %278 = vmatprep.subr.bf16.mxu0 0
        %279 = vmatpush1.bf16.msra.mxu0 0
        %280 = vmatprep.mubr.bf16.mxu0 0
        %281 = vmatmul.mubr.bf16.gmra.mrb[0].mxu0 %v246
        %v282 = vpop.f32.mrb[0].mxu0
        %v283 = vadd.f32 %v230, %v282
        %v284 = vpop.f32.mrb[0].mxu0
        %v285 = vpop.f32.mrb[0].mxu0
        %v286 = vpop.f32.mrb[0].mxu0
        %287 = vdwg.mxu0
        %v288 = vpack.c.bf16 %v283, %v283
        %vm289 = vcmask 519168
        %290 = vst.msk [vmem:[%s217] sm:$0xf] %vm289, %v288
        %s291 = sand.u32 %s113, 1
        %s292 = scalar_lea.sflag [#allocation4], %s291
        %s293 = sand.u32 %s113, 1
        %s294 = smul.addr %s293, 4
        %s295 = scalar_lea.vmem [#allocation7], %s294
        // Predicated region
        $region41: #{tpu_custom_call.1} parent=31 // pred_check
          %p296 = pneg %p123
        $region42: #{tpu_custom_call.1} parent=31 // pred_check_branch
          %298 = sbr.rel (%p296) target = $region44
        $region43: #{tpu_custom_call.1} parent=31 // pred_region
          %s300 = ssub.s32 64, 64
          %301 = vsyncadd %s292, %s300
          %s302 = sadd.s32 %s26, %s25
          %s303 = smul.addr %s302, 64
          %s304 = scalar_lea.hbm %s3, %s303
          %s306 = sshll.u32 %s295, 4
          %s307 = int_to_ptr.vmem [resolvable:$true] %s306
          %309 = dma.vmem_to_hbm [thread:$0]  %s307, 64, %s304, %s292
        $region44: #{tpu_custom_call.1} parent=31 // pred_fallthru
          _
      $region32: #{tpu_custom_call.1} parent=5 // pred_fallthru
        _
      %p310 = scmp.le.s32.totalorder 2, %s16
      // Predicated region
      $region45: #{tpu_custom_call.1} parent=5 // pred_check
        %p311 = pneg %p310
      $region46: #{tpu_custom_call.1} parent=5 // pred_check_branch
        %313 = sbr.rel (%p311) target = $region48
      $region47: #{tpu_custom_call.1} parent=5 // pred_region
        %s314 = ssub.s32 %s16, 2
        // Predicated region
        $region49: #{tpu_custom_call.1} parent=47 // pred_check
          %p315 = pneg %p129
        $region50: #{tpu_custom_call.1} parent=47 // pred_check_branch
          %317 = sbr.rel (%p315) target = $region52
        $region51: #{tpu_custom_call.1} parent=47 // pred_region
          %s318 = sand.u32 %s114, 1
          %s319 = scalar_lea.sflag [#allocation4], %s318
          %s320 = sand.u32 %s114, 1
          %s321 = smul.addr %s320, 4
          %s322 = scalar_lea.vmem [#allocation7], %s321
          %323 = dma.done %s319, 64
        $region52: #{tpu_custom_call.1} parent=47 // pred_fallthru
          _
      $region48: #{tpu_custom_call.1} parent=5 // pred_fallthru
        _
    $region6: #{tpu_custom_call.1} parent=1 // loop_footer
      %s20 = sadd.s32 1, %s16
    $region7: #{tpu_custom_call.1} parent=1 // loop_footer_branch
      %15 = sbr.rel target = $region3
    $region8: #{tpu_custom_call.1} parent=1 // loop_exit
      _
    %324 = vsyncpa [#allocation3], 1
    %s325 = scalar_lea.sflag [#allocation3], 1
    %326 = vsyncpa %s325, 1
    %327 = vsyncpa [#allocation6], 1
    %328 = vsyncpa [#allocation4], 1
    %s329 = scalar_lea.sflag [#allocation4], 1
    %330 = vsyncpa %s329, 1

</llo_original>
